<compile_context>
chip_gen: v7x
topology: tpu7x:2x2x1
jax: 0.10.0
libtpu: 0.0.40
codegen_flags: <defaults>
</compile_context>

<pallas_src>
import functools

import jax
import jax.numpy as jnp
from jax import lax
from jax.experimental import pallas as pl
from jax.experimental.pallas import tpu as pltpu


def _round_up(v, m):
    return (v + m - 1) // m * m


@functools.lru_cache(maxsize=1)
def _vmem_cap_bytes():
    try:
        cap = getattr(pltpu.get_tpu_info(), "vmem_capacity_bytes", None)
        if cap:
            return int(cap)
    except Exception:
        pass
    return 64 * 2 ** 20   # conservative (v7x per-TensorCore VMEM)


def _pick_strip_rows(H, row_pitch, N):
    """Pick TH dividing H.  Slab rows per strip = TH*row_pitch, multiple of 8,
    targeting 512-2048 rows per strip while keeping N*(H//TH) >= 2 grid steps."""
    divs = [t for t in range(1, H + 1) if H % t == 0 and (t * row_pitch) % 8 == 0]
    if not divs:
        return H                              # full-extent block (always legal)
    in_window = [t for t in divs if 512 <= t * row_pitch <= 2048]
    if in_window:
        th = in_window[-1]
    else:
        under = [t for t in divs if t * row_pitch < 512]
        th = under[-1] if under else divs[0]
    if N * (H // th) < 2:                     # keep both v7x TensorCores busy
        smaller = [t for t in divs if t < th]
        if smaller:
            th = smaller[-1]
    return th


# ---------------------------------------------------------------------------
# Kernels
# ---------------------------------------------------------------------------

def _im2col_head_kernel(p_ref, w1_ref, shift_ref, w2_ref, b2_ref, o_ref):
    # p_ref:     (1, L, Kp)  im2col patch strip (9*Cin channels zero-padded to Kp)
    # w1_ref:    (Kp, Cp)    BN-scale-folded 3x3 conv as a single K=Kp matmul
    # shift_ref: (1, Cp)     folded shift = (b1 - mean)*gamma/sqrt(var+eps) + beta
    # w2_ref:    (Cp, Dp)    1x1 conv weight
    # b2_ref:    (1, Dp)     1x1 conv bias
    # o_ref:     (1, L, Dp)  lane-dense output strip (single unmasked store)
    acc = jnp.dot(p_ref[0], w1_ref[...], preferred_element_type=jnp.float32)
    h = jnp.maximum(acc + shift_ref[0], 0.0).astype(w2_ref.dtype)
    out = jnp.dot(h, w2_ref[...], preferred_element_type=jnp.float32) + b2_ref[0]
    o_ref[0, :, :] = out.astype(o_ref.dtype)


def _per_tap_head_kernel(x_ref, w1_ref, shift_ref, w2_ref, b2_ref, o_ref,
                         *, TH, Wp, Cp):
    # x_ref:     (1, Hp*Wp, Cp)  whole zero-padded NHWC image flattened to rows
    #                            (row pitch Wp % 8 == 0 -> aligned strip bases and
    #                            dy*Wp tap offsets); revisited across the strip axis.
    # w1_ref:    (9, Cp, Cp)     BN-scale-folded 3x3 taps, tap t = dy*3 + dx, [in, out]
    # o_ref:     (1, TH*Wp, Dp)  lane-dense output strip incl. wrap/pad columns
    #                            (sliced off in the wrapper) -> one full-slab store.
    s = pl.program_id(1)
    L = TH * Wp
    base = pl.multiple_of(s * L, 8)

    acc = jnp.zeros((L, Cp), dtype=jnp.float32)
    for dy in range(3):
        for dx in range(3):
            patch = x_ref[0, pl.ds(base + dy * Wp + dx, L), :]     # (L, Cp)
            acc = acc + jnp.dot(patch, w1_ref[dy * 3 + dx],
                                preferred_element_type=jnp.float32)

    h = jnp.maximum(acc + shift_ref[0], 0.0).astype(w2_ref.dtype)
    out = jnp.dot(h, w2_ref[...], preferred_element_type=jnp.float32) + b2_ref[0]
    o_ref[0, :, :] = out.astype(o_ref.dtype)


# ---------------------------------------------------------------------------
# Wrapper
# ---------------------------------------------------------------------------

@functools.partial(jax.jit, static_argnames=("compute_dtype", "out_dtype",
                                              "strip_rows", "use_im2col"))
def embedding_head_pallas(x_nchw, params, *, compute_dtype=jnp.bfloat16,
                          out_dtype=jnp.float32, strip_rows=None, use_im2col=None):
    """AnchorFreeModule forward.  x_nchw: (N, Cin, H, W) -> (N, Dout, H, W)."""
    w1, b1, gamma, beta, run_mean, run_var, eps, w2, b2 = params
    N, Cin, H, W = x_nchw.shape
    Dout = w2.shape[0]

    Cp = _round_up(Cin, 128)          # lane-dense intermediate channels
    Dp = _round_up(Dout, 128)         # lane-dense output channels
    if use_im2col is None:
        use_im2col = (9 * Cin <= 128)  # patch slab no wider than Cp-padded slab

    dsize = jnp.dtype(compute_dtype).itemsize
    osize = jnp.dtype(out_dtype).itemsize
    vcap = _vmem_cap_bytes()

    # --- BN (eval) fold: scale into conv1 weights; shift absorbs bias/mean/beta ---
    scale = gamma / jnp.sqrt(run_var + eps)                       # (Cin,)
    w1_f = w1 * scale[:, None, None, None]                        # per OUT channel
    shift = (b1 - run_mean) * scale + beta                        # (Cin,)
    shift_row = jnp.pad(shift, (0, Cp - Cin)).reshape(1, Cp).astype(jnp.float32)
    b2_row = jnp.pad(b2, (0, Dp - Dout)).reshape(1, Dp).astype(jnp.float32)
    w2_mat = jnp.pad(jnp.transpose(w2.reshape(Dout, Cin), (1, 0)),
                     ((0, Cp - Cin), (0, Dp - Dout))).astype(compute_dtype)

    x_nhwc = jnp.transpose(x_nchw, (0, 2, 3, 1))                  # (N, H, W, Cin)

    if use_im2col:
        # ------------------ small-Cin path: one K=Kp matmul per strip ------------
        Kp = _round_up(9 * Cin, 128)
        TH = strip_rows if strip_rows is not None else _pick_strip_rows(H, W, N)
        assert H % TH == 0
        nS = H // TH
        L = TH * W

        # (Cout, Cin, 3, 3) -> (3,3,Cin,Cout) -> (9*Cin, Cout), pad to (Kp, Cp).
        w1_mat = jnp.transpose(w1_f, (2, 3, 1, 0)).reshape(9 * Cin, Cin)
        w1_mat = jnp.pad(w1_mat, ((0, Kp - 9 * Cin), (0, Cp - Cin))
                         ).astype(compute_dtype)

        # im2col slab (single fused XLA pass): (N, H*W, Kp), channels lane-dense.
        x_pad = jnp.pad(x_nhwc, ((0, 0), (1, 1), (1, 1), (0, 0)))
        taps = [x_pad[:, dy:dy + H, dx:dx + W, :]
                for dy in range(3) for dx in range(3)]
        patches = jnp.concatenate(taps, axis=-1)                  # (N, H, W, 9*Cin)
        patches = jnp.pad(patches, ((0, 0), (0, 0), (0, 0), (0, Kp - 9 * Cin))
                          ).astype(compute_dtype)
        p_flat = patches.reshape(N, H * W, Kp)

        est = (2 * L * Kp * dsize                                 # input strip (dbuf)
               + 2 * (Kp * Cp + Cp * Dp) * dsize + 2 * (Cp + Dp) * 4   # weights
               + 2 * L * Dp * osize                               # output strip (dbuf)
               + 3 * L * max(Cp, Dp) * 4)                         # acc / h / out temps
        vmem_limit = int(min(max(2 * est, 32 * 2 ** 20),
                             max(vcap - 8 * 2 ** 20, 32 * 2 ** 20)))

        out_flat = pl.pallas_call(
            _im2col_head_kernel,
            out_shape=jax.ShapeDtypeStruct((N, H * W, Dp), out_dtype),
            grid=(N, nS),
            in_specs=[
                pl.BlockSpec((1, L, Kp), lambda n, s: (n, s, 0)),
                pl.BlockSpec((Kp, Cp), lambda n, s: (0, 0)),
                pl.BlockSpec((1, Cp), lambda n, s: (0, 0)),
                pl.BlockSpec((Cp, Dp), lambda n, s: (0, 0)),
                pl.BlockSpec((1, Dp), lambda n, s: (0, 0)),
            ],
            out_specs=pl.BlockSpec((1, L, Dp), lambda n, s: (n, s, 0)),
            compiler_params=pltpu.CompilerParams(
                dimension_semantics=("parallel", "parallel"),
                vmem_limit_bytes=vmem_limit),
        )(p_flat, w1_mat, shift_row, w2_mat, b2_row)

        out = out_flat[:, :, :Dout].reshape(N, H, W, Dout)
    else:
        # ------------------ large-Cin path: 9 contiguous row-offset taps ---------
        Wp = _round_up(W + 2, 8)      # sublane-aligned row pitch
        Hp = H + 3                    # pad H by (1, 2): keeps last strip's taps in bounds
        TH = strip_rows if strip_rows is not None else _pick_strip_rows(H, Wp, N)
        assert H % TH == 0
        nS = H // TH
        L = TH * Wp

        # (Cout, Cin, 3, 3) -> (9, Cin_in, Cout), pad channels, cast for the MXU.
        w1_taps = jnp.transpose(w1_f, (2, 3, 1, 0)).reshape(9, Cin, Cin)
        w1_taps = jnp.pad(w1_taps, ((0, 0), (0, Cp - Cin), (0, Cp - Cin))
                          ).astype(compute_dtype)

        # Pad H by (1,2), W by (1, Wp-W-1), channels to Cp; flatten rows.
        x_pad = jnp.pad(x_nhwc, ((0, 0), (1, 2), (1, Wp - W - 1), (0, Cp - Cin))
                        ).astype(compute_dtype)
        x_flat = x_pad.reshape(N, Hp * Wp, Cp)

        est = (2 * Hp * Wp * Cp * dsize                           # image slab (dbuf)
               + 2 * (9 * Cp * Cp + Cp * Dp) * dsize + 2 * (Cp + Dp) * 4
               + 2 * L * Dp * osize                               # output strip (dbuf)
               + 3 * L * max(Cp, Dp) * 4)                         # temporaries
        vmem_limit = int(min(max(2 * est, 32 * 2 ** 20),
                             max(vcap - 8 * 2 ** 20, 32 * 2 ** 20)))

        kernel = functools.partial(_per_tap_head_kernel, TH=TH, Wp=Wp, Cp=Cp)

        out_flat = pl.pallas_call(
            kernel,
            out_shape=jax.ShapeDtypeStruct((N, H * Wp, Dp), out_dtype),
            grid=(N, nS),
            in_specs=[
                pl.BlockSpec((1, Hp * Wp, Cp), lambda n, s: (n, 0, 0)),
                pl.BlockSpec((9, Cp, Cp), lambda n, s: (0, 0, 0)),
                pl.BlockSpec((1, Cp), lambda n, s: (0, 0)),
                pl.BlockSpec((Cp, Dp), lambda n, s: (0, 0)),
                pl.BlockSpec((1, Dp), lambda n, s: (0, 0)),
            ],
            out_specs=pl.BlockSpec((1, L, Dp), lambda n, s: (n, s, 0)),
            compiler_params=pltpu.CompilerParams(
                dimension_semantics=("parallel", "parallel"),
                vmem_limit_bytes=vmem_limit),
        )(x_flat, w1_taps, shift_row, w2_mat, b2_row)

        out = out_flat.reshape(N, H, Wp, Dp)[:, :, :W, :Dout]

    # Restore NCHW like PyTorch.
    return jnp.transpose(out, (0, 3, 1, 2)).astype(out_dtype)


def track_head_tea_forward(embeddings, params, compute_dtype=jnp.bfloat16):
    """TrackHeadTea.forward: dict with the teacher track embedding."""
    return {"teacher_track_embedding":
            embedding_head_pallas(embeddings[0], params,
                                  compute_dtype=compute_dtype)}


# ---------------------------------------------------------------------------
# Pure-JAX reference + test harness
# ---------------------------------------------------------------------------

def _reference_forward(x_nchw, params):
    """Pure-JAX reference (lax.conv) for correctness checking."""
    w1, b1, gamma, beta, run_mean, run_var, eps, w2, b2 = params
    y = lax.conv_general_dilated(
        x_nchw, w1, window_strides=(1, 1), padding="SAME",
        dimension_numbers=("NCHW", "OIHW", "NCHW"))
    y = y + b1[None, :, None, None]
    y = (y - run_mean[None, :, None, None]) / jnp.sqrt(
        run_var + eps)[None, :, None, None]
    y = y * gamma[None, :, None, None] + beta[None, :, None, None]
    y = jnp.maximum(y, 0.0)
    z = lax.conv_general_dilated(
        y, w2, window_strides=(1, 1), padding="VALID",
        dimension_numbers=("NCHW", "OIHW", "NCHW"))
    return z + b2[None, :, None, None]


def _init_params(key, in_channels, feature_dim):
    ks = jax.random.split(key, 6)
    w1 = 0.1 * jax.random.normal(ks[0], (in_channels, in_channels, 3, 3),
                                 jnp.float32)
    b1 = 0.05 * jax.random.normal(ks[1], (in_channels,), jnp.float32)
    gamma = 1.0 + 0.1 * jax.random.normal(ks[2], (in_channels,), jnp.float32)
    beta = 0.1 * jax.random.normal(ks[3], (in_channels,), jnp.float32)
    run_mean = jnp.zeros((in_channels,), jnp.float32)
    run_var = jnp.ones((in_channels,), jnp.float32)
    eps = jnp.float32(1e-5)
    w2 = 0.1 * jax.random.normal(ks[4], (feature_dim, in_channels, 1, 1),
                                 jnp.float32)
    b2 = 0.05 * jax.random.normal(ks[5], (feature_dim,), jnp.float32)
    return (w1, b1, gamma, beta, run_mean, run_var, eps, w2, b2)


if __name__ == "__main__":
    key = jax.random.PRNGKey(0)
    k_param, k_x = jax.random.split(key)

    N, Cin, H, W = 2, 8, 16, 16
    feature_dim = 32

    params = _init_params(k_param, Cin, feature_dim)
    x = jax.random.normal(k_x, (N, Cin, H, W), jnp.float32)  # NCHW like PyTorch

    ref = jax.block_until_ready(_reference_forward(x, params))

    # 1) f32 im2col path (auto-selected for Cin=8): tight check vs lax.conv.
    out_f32 = jax.block_until_ready(
        embedding_head_pallas(x, params, compute_dtype=jnp.float32))
    assert out_f32.shape == (N, feature_dim, H, W), out_f32.shape
    assert jnp.allclose(out_f32, ref, atol=1e-4, rtol=1e-4), float(
        jnp.max(jnp.abs(out_f32 - ref)))

    # 2) Default production path (bf16 MXU, f32 accumulation): looser tolerance.
    out_bf16 = jax.block_until_ready(
        track_head_tea_forward([x], params)["teacher_track_embedding"])
    assert out_bf16.shape == (N, feature_dim, H, W), out_bf16.shape
    assert jnp.allclose(out_bf16, ref, atol=5e-2, rtol=5e-2), float(
        jnp.max(jnp.abs(out_bf16 - ref)))

    # 3) Large-Cin per-tap path (forced) in f32: tight check of the second path.
    out_tap = jax.block_until_ready(
        embedding_head_pallas(x, params, compute_dtype=jnp.float32,
                              use_im2col=False))
    assert out_tap.shape == (N, feature_dim, H, W), out_tap.shape
    assert jnp.allclose(out_tap, ref, atol=1e-4, rtol=1e-4), float(
        jnp.max(jnp.abs(out_tap - ref)))

    print("KERNEL_OK")
</pallas_src>

<mosaic_0001>
module attributes {stable_mosaic.version = 11 : i64} {
  func.func @_im2col_head_kernel(%arg0: i32, %arg1: i32, %arg2: memref<1x256x128xf32, #tpu.memory_space<vmem>>, %arg3: memref<128x128xf32, #tpu.memory_space<vmem>>, %arg4: memref<1x128xf32, #tpu.memory_space<vmem>>, %arg5: memref<128x128xf32, #tpu.memory_space<vmem>>, %arg6: memref<1x128xf32, #tpu.memory_space<vmem>>, %arg7: memref<1x256x128xf32, #tpu.memory_space<vmem>>) attributes {dimension_semantics = [#tpu.dimension_semantics<parallel>, #tpu.dimension_semantics<parallel>], iteration_bounds = array<i64: 2, 1>, scalar_prefetch = 0 : i64, scratch_operands = 0 : i64, tpu.core_type = #tpu.core_type<tc>, window_params = [{transform_indices = @transform_0, window_bounds = array<i64: 1, 256, 128>}, {pipeline_mode = #tpu.pipeline_mode<synchronous>, transform_indices = @transform_1, window_bounds = array<i64: 128, 128>}, {pipeline_mode = #tpu.pipeline_mode<synchronous>, transform_indices = @transform_2, window_bounds = array<i64: 1, 128>}, {pipeline_mode = #tpu.pipeline_mode<synchronous>, transform_indices = @transform_3, window_bounds = array<i64: 128, 128>}, {pipeline_mode = #tpu.pipeline_mode<synchronous>, transform_indices = @transform_4, window_bounds = array<i64: 1, 128>}, {transform_indices = @transform_5, window_bounds = array<i64: 1, 256, 128>}]} {
    %c0 = arith.constant 0 : index
    %c0_0 = arith.constant 0 : index
    %c0_1 = arith.constant 0 : index
    %0 = vector.load %arg2[%c0, %c0_0, %c0_1] : memref<1x256x128xf32, #tpu.memory_space<vmem>>, vector<1x256x128xf32>
    %1 = vector.shape_cast %0 : vector<1x256x128xf32> to vector<256x128xf32>
    %c0_2 = arith.constant 0 : index
    %c0_3 = arith.constant 0 : index
    %2 = vector.load %arg3[%c0_2, %c0_3] : memref<128x128xf32, #tpu.memory_space<vmem>>, vector<128x128xf32>
    %cst = arith.constant dense<0.000000e+00> : vector<256x128xf32>
    %3 = tpu.matmul %1, %2, %cst {dimension_numbers = #tpu.dot_dimension_numbers<[1], [0], [0], [1], [0, 0, 1, 1], [], []>} : vector<256x128xf32>, vector<128x128xf32>, vector<256x128xf32> -> vector<256x128xf32>
    %c0_4 = arith.constant 0 : index
    %c0_5 = arith.constant 0 : index
    %4 = vector.load %arg4[%c0_4, %c0_5] : memref<1x128xf32, #tpu.memory_space<vmem>>, vector<1x128xf32>
    %5 = vector.shape_cast %4 : vector<1x128xf32> to vector<128xf32>
    %6 = vector.shape_cast %5 : vector<128xf32> to vector<1x128xf32>
    %7 = vector.broadcast %6 : vector<1x128xf32> to vector<256x128xf32>
    %8 = arith.addf %3, %7 : vector<256x128xf32>
    %cst_6 = arith.constant 0.000000e+00 : f32
    %9 = vector.broadcast %cst_6 : f32 to vector<256x128xf32>
    %10 = arith.maximumf %8, %9 : vector<256x128xf32>
    %c0_7 = arith.constant 0 : index
    %c0_8 = arith.constant 0 : index
    %11 = vector.load %arg5[%c0_7, %c0_8] : memref<128x128xf32, #tpu.memory_space<vmem>>, vector<128x128xf32>
    %cst_9 = arith.constant dense<0.000000e+00> : vector<256x128xf32>
    %12 = tpu.matmul %10, %11, %cst_9 {dimension_numbers = #tpu.dot_dimension_numbers<[1], [0], [0], [1], [0, 0, 1, 1], [], []>} : vector<256x128xf32>, vector<128x128xf32>, vector<256x128xf32> -> vector<256x128xf32>
    %c0_10 = arith.constant 0 : index
    %c0_11 = arith.constant 0 : index
    %13 = vector.load %arg6[%c0_10, %c0_11] : memref<1x128xf32, #tpu.memory_space<vmem>>, vector<1x128xf32>
    %14 = vector.shape_cast %13 : vector<1x128xf32> to vector<128xf32>
    %15 = vector.shape_cast %14 : vector<128xf32> to vector<1x128xf32>
    %16 = vector.broadcast %15 : vector<1x128xf32> to vector<256x128xf32>
    %17 = arith.addf %12, %16 : vector<256x128xf32>
    %c0_12 = arith.constant 0 : index
    %c0_13 = arith.constant 0 : index
    %c0_14 = arith.constant 0 : index
    %18 = vector.load %arg7[%c0_12, %c0_13, %c0_14] : memref<1x256x128xf32, #tpu.memory_space<vmem>>, vector<1x256x128xf32>
    %19 = vector.shape_cast %18 : vector<1x256x128xf32> to vector<256x128xf32>
    %20 = vector.shape_cast %17 : vector<256x128xf32> to vector<1x256x128xf32>
    tpu.vector_store %arg7[%c0_12, %c0_13, %c0_14], %20 {strides = array<i32>} : memref<1x256x128xf32, #tpu.memory_space<vmem>>, vector<1x256x128xf32>,
    return
  }
  func.func @transform_0(%arg0: i32, %arg1: i32) -> (i32, i32, i32) {
    %c0_i32 = arith.constant 0 : i32
    %c0_i32_0 = arith.constant 0 : i32
    return %arg0, %arg1, %c0_i32 : i32, i32, i32
  }
  func.func @transform_1(%arg0: i32, %arg1: i32) -> (i32, i32) {
    %c0_i32 = arith.constant 0 : i32
    %c0_i32_0 = arith.constant 0 : i32
    %c0_i32_1 = arith.constant 0 : i32
    return %c0_i32, %c0_i32_0 : i32, i32
  }
  func.func @transform_2(%arg0: i32, %arg1: i32) -> (i32, i32) {
    %c0_i32 = arith.constant 0 : i32
    %c0_i32_0 = arith.constant 0 : i32
    %c0_i32_1 = arith.constant 0 : i32
    return %c0_i32, %c0_i32_0 : i32, i32
  }
  func.func @transform_3(%arg0: i32, %arg1: i32) -> (i32, i32) {
    %c0_i32 = arith.constant 0 : i32
    %c0_i32_0 = arith.constant 0 : i32
    %c0_i32_1 = arith.constant 0 : i32
    return %c0_i32, %c0_i32_0 : i32, i32
  }
  func.func @transform_4(%arg0: i32, %arg1: i32) -> (i32, i32) {
    %c0_i32 = arith.constant 0 : i32
    %c0_i32_0 = arith.constant 0 : i32
    %c0_i32_1 = arith.constant 0 : i32
    return %c0_i32, %c0_i32_0 : i32, i32
  }
  func.func @transform_5(%arg0: i32, %arg1: i32) -> (i32, i32, i32) {
    %c0_i32 = arith.constant 0 : i32
    %c0_i32_0 = arith.constant 0 : i32
    return %arg0, %arg1, %c0_i32 : i32, i32, i32
  }
}

</mosaic_0001>

<llo_original>
// kernel: embedding_head_pallas.1
$region0: #{embedding_head_pallas.1}
  #allocation0 [shape = 'u32[]', space=smem, size = 0x4, offset = 0x4, fixed_abs, tag = 'smem constant byte address 0x4 - core index']
  #allocation1 [shape = 'u32[144,128]{1,0:T(1,128)}', space=vmem, size = 0x12000, scoped, tag = 'internal scratch']
  %s0 = inlined_call_operand.vmem [shape: f32[2,256,128], index: 0, kind: input, shape index: {}]
  %s1 = inlined_call_operand.vmem [shape: f32[128,128], index: 1, kind: input, shape index: {}]
  %s2 = inlined_call_operand.vmem [shape: f32[1,128], index: 2, kind: input, shape index: {}]
  %s3 = inlined_call_operand.vmem [shape: f32[128,128], index: 3, kind: input, shape index: {}]
  %s4 = inlined_call_operand.vmem [shape: f32[1,128], index: 4, kind: input, shape index: {}]
  %s5 = inlined_call_operand.hbm [shape: f32[2,256,128], index: 5, kind: output, shape index: {}]
  %s6 = sld [smem:[#allocation0]]
  $region53: #{embedding_head_pallas.1} parent=0
    _
  %s8 = ssub.s32 1, %s6
  %s9 = scalar_select 0, %s8, %s6
  $region1: #{embedding_head_pallas.1} parent=0
    #allocation2 [shape = 'u8[262144]{0}', space=vmem, size = 0x40000, scoped, tag = 'output window, operand 0']
    #allocation3 [shape = 's32[2]{0}', space=sflag, size = 0x8, scoped, tag = 'scoped memory for embedding_head_pallas.1']
    %10 = vsyncpa [#allocation3], 0
    %s11 = scalar_lea.sflag [#allocation3], 1
    %12 = vsyncpa %s11, 0
    loop: start=0, step=1, limit=4
    $region2: #{embedding_head_pallas.1} parent=1 // loop_pre_header
      _
    $region3: #{embedding_head_pallas.1} parent=1 // loop_header
      %s14 = sphi 0, %s18
      %p15 = scmp.ge.s32.totalorder %s14, 4
      %s21 = sphi 0, %s33
      %s22 = sphi 0, %s29
      %s23 = sphi 0, %s21
      %s24 = sphi 0, %s22
      %s25 = sphi 0, %s23
      %s26 = sphi 0, %s24
      %s38 = sphi 0, %s40
      %s41 = sphi 0, %s38
      %s42 = sphi 0, %s41
      %s58 = sphi 0, %s42
      %s62 = sphi 0, %s62
      %s64 = sphi 0, %s62
      %s65 = sphi 0, %s64
      %s79 = sphi 0, %s65
      %s83 = sphi 0, %s83
      %s85 = sphi 0, %s83
      %s86 = sphi 0, %s85
      %s100 = sphi 0, %s86
      %s104 = sphi 0, %s104
      %s106 = sphi 0, %s104
      %s107 = sphi 0, %s106
      %s121 = sphi 0, %s107
      %s125 = sphi 0, %s125
      %s127 = sphi 0, %s125
      %s128 = sphi 0, %s127
      %s142 = sphi 0, %s128
      %s150 = sphi 0, %s152
      %s153 = sphi 0, %s150
      %s154 = sphi 0, %s153
      %s170 = sphi 0, %s154
    $region4: #{embedding_head_pallas.1} parent=1 // loop_header_branch
      %17 = sbr.rel (%p15) target = $region8
    $region5: #{embedding_head_pallas.1} parent=1 // loop_body
      %s19 = ssub.s32 %s14, 1
      %s20 = ssub.s32 %s14, 2
      %s27 = sadd.s32 1, %s22
      %p28 = scmp.ge.s32.totalorder %s27, 1
      %s29 = scalar_select %p28, 0, %s27
      %s30 = sadd.s32 1, %s21
      %s31 = scalar_select %p28, %s30, %s21
      %p32 = scmp.ge.s32.totalorder %s31, 2
      %s33 = scalar_select %p32, 0, %s31
      %s34 = ssub.s32 %s21, %s33
      %s35 = ssub.s32 %s22, %s29
      %s36 = sor.u32 %s34, %s35
      %p37 = scmp.eq.s32.totalorder %s36, 0
      %s39 = sadd.s32 %s38, 1
      %s40 = scalar_select %p37, %s38, %s39
      %p43 = pneg %p37
      %p44 = scmp.eq.s32.totalorder %s14, 1
      %p45 = por %p43, %p44
      %p46 = scmp.ne.s32.totalorder %s38, %s41
      %p47 = scmp.eq.s32.totalorder %s14, 0
      %p48 = por %p46, %p47
      %p49 = scmp.ne.s32.totalorder %s38, %s41
      %p50 = scmp.eq.s32.totalorder %s19, 1
      %p51 = por %p49, %p50
      %p52 = scmp.ne.s32.totalorder %s41, %s42
      %p53 = scmp.eq.s32.totalorder %s19, 0
      %p54 = por %p52, %p53
      %p55 = scmp.ne.s32.totalorder %s41, %s42
      %p56 = scmp.eq.s32.totalorder %s20, 1
      %p57 = por %p55, %p56
      %p59 = scmp.ne.s32.totalorder %s42, %s58
      %p60 = scmp.eq.s32.totalorder %s20, 0
      %p61 = por %p59, %p60
      %s63 = sadd.s32 %s62, 1
      %p66 = scmp.eq.s32.totalorder %s14, 1
      %p67 = scmp.ne.s32.totalorder %s62, %s64
      %p68 = scmp.eq.s32.totalorder %s14, 0
      %p69 = por %p67, %p68
      %p70 = scmp.ne.s32.totalorder %s62, %s64
      %p71 = scmp.eq.s32.totalorder %s19, 1
      %p72 = por %p70, %p71
      %p73 = scmp.ne.s32.totalorder %s64, %s65
      %p74 = scmp.eq.s32.totalorder %s19, 0
      %p75 = por %p73, %p74
      %p76 = scmp.ne.s32.totalorder %s64, %s65
      %p77 = scmp.eq.s32.totalorder %s20, 1
      %p78 = por %p76, %p77
      %p80 = scmp.ne.s32.totalorder %s65, %s79
      %p81 = scmp.eq.s32.totalorder %s20, 0
      %p82 = por %p80, %p81
      %s84 = sadd.s32 %s83, 1
      %p87 = scmp.eq.s32.totalorder %s14, 1
      %p88 = scmp.ne.s32.totalorder %s83, %s85
      %p89 = scmp.eq.s32.totalorder %s14, 0
      %p90 = por %p88, %p89
      %p91 = scmp.ne.s32.totalorder %s83, %s85
      %p92 = scmp.eq.s32.totalorder %s19, 1
      %p93 = por %p91, %p92
      %p94 = scmp.ne.s32.totalorder %s85, %s86
      %p95 = scmp.eq.s32.totalorder %s19, 0
      %p96 = por %p94, %p95
      %p97 = scmp.ne.s32.totalorder %s85, %s86
      %p98 = scmp.eq.s32.totalorder %s20, 1
      %p99 = por %p97, %p98
      %p101 = scmp.ne.s32.totalorder %s86, %s100
      %p102 = scmp.eq.s32.totalorder %s20, 0
      %p103 = por %p101, %p102
      %s105 = sadd.s32 %s104, 1
      %p108 = scmp.eq.s32.totalorder %s14, 1
      %p109 = scmp.ne.s32.totalorder %s104, %s106
      %p110 = scmp.eq.s32.totalorder %s14, 0
      %p111 = por %p109, %p110
      %p112 = scmp.ne.s32.totalorder %s104, %s106
      %p113 = scmp.eq.s32.totalorder %s19, 1
      %p114 = por %p112, %p113
      %p115 = scmp.ne.s32.totalorder %s106, %s107
      %p116 = scmp.eq.s32.totalorder %s19, 0
      %p117 = por %p115, %p116
      %p118 = scmp.ne.s32.totalorder %s106, %s107
      %p119 = scmp.eq.s32.totalorder %s20, 1
      %p120 = por %p118, %p119
      %p122 = scmp.ne.s32.totalorder %s107, %s121
      %p123 = scmp.eq.s32.totalorder %s20, 0
      %p124 = por %p122, %p123
      %s126 = sadd.s32 %s125, 1
      %p129 = scmp.eq.s32.totalorder %s14, 1
      %p130 = scmp.ne.s32.totalorder %s125, %s127
      %p131 = scmp.eq.s32.totalorder %s14, 0
      %p132 = por %p130, %p131
      %p133 = scmp.ne.s32.totalorder %s125, %s127
      %p134 = scmp.eq.s32.totalorder %s19, 1
      %p135 = por %p133, %p134
      %p136 = scmp.ne.s32.totalorder %s127, %s128
      %p137 = scmp.eq.s32.totalorder %s19, 0
      %p138 = por %p136, %p137
      %p139 = scmp.ne.s32.totalorder %s127, %s128
      %p140 = scmp.eq.s32.totalorder %s20, 1
      %p141 = por %p139, %p140
      %p143 = scmp.ne.s32.totalorder %s128, %s142
      %p144 = scmp.eq.s32.totalorder %s20, 0
      %p145 = por %p143, %p144
      %s146 = ssub.s32 %s21, %s33
      %s147 = ssub.s32 %s22, %s29
      %s148 = sor.u32 %s146, %s147
      %p149 = scmp.eq.s32.totalorder %s148, 0
      %s151 = sadd.s32 %s150, 1
      %s152 = scalar_select %p149, %s150, %s151
      %p155 = pneg %p149
      %p156 = scmp.eq.s32.totalorder %s14, 1
      %p157 = por %p155, %p156
      %p158 = scmp.ne.s32.totalorder %s150, %s153
      %p159 = scmp.eq.s32.totalorder %s14, 0
      %p160 = por %p158, %p159
      %p161 = scmp.ne.s32.totalorder %s150, %s153
      %p162 = scmp.eq.s32.totalorder %s19, 1
      %p163 = por %p161, %p162
      %p164 = scmp.ne.s32.totalorder %s153, %s154
      %p165 = scmp.eq.s32.totalorder %s19, 0
      %p166 = por %p164, %p165
      %p167 = scmp.ne.s32.totalorder %s153, %s154
      %p168 = scmp.eq.s32.totalorder %s20, 1
      %p169 = por %p167, %p168
      %p171 = scmp.ne.s32.totalorder %s154, %s170
      %p172 = scmp.eq.s32.totalorder %s20, 0
      %p173 = por %p171, %p172
      %p174 = scmp.le.s32.totalorder 1, %s14
      %p175 = scmp.lt.s32.totalorder %s14, 3
      %p176 = pnand %p174, %p175
      %p177 = pneg %p176
      // Predicated region
      $region9: #{embedding_head_pallas.1} parent=5 // pred_check
        _
      $region10: #{embedding_head_pallas.1} parent=5 // pred_check_branch
        %179 = sbr.rel (%p176) target = $region12
      $region11: #{embedding_head_pallas.1} parent=5 // pred_region
        %s180 = ssub.s32 %s14, 1
        // Predicated region
        $region13: #{embedding_head_pallas.1} parent=11 // pred_check
          %p181 = pneg %p75
        $region14: #{embedding_head_pallas.1} parent=11 // pred_check_branch
          %183 = sbr.rel (%p181) target = $region16
        $region15: #{embedding_head_pallas.1} parent=11 // pred_region
          _
        $region16: #{embedding_head_pallas.1} parent=11 // pred_fallthru
          _
        // Predicated region
        $region17: #{embedding_head_pallas.1} parent=11 // pred_check
          %p184 = pneg %p96
        $region18: #{embedding_head_pallas.1} parent=11 // pred_check_branch
          %186 = sbr.rel (%p184) target = $region20
        $region19: #{embedding_head_pallas.1} parent=11 // pred_region
          _
        $region20: #{embedding_head_pallas.1} parent=11 // pred_fallthru
          _
        // Predicated region
        $region21: #{embedding_head_pallas.1} parent=11 // pred_check
          %p187 = pneg %p117
        $region22: #{embedding_head_pallas.1} parent=11 // pred_check_branch
          %189 = sbr.rel (%p187) target = $region24
        $region23: #{embedding_head_pallas.1} parent=11 // pred_region
          _
        $region24: #{embedding_head_pallas.1} parent=11 // pred_fallthru
          _
        // Predicated region
        $region25: #{embedding_head_pallas.1} parent=11 // pred_check
          %p190 = pneg %p138
        $region26: #{embedding_head_pallas.1} parent=11 // pred_check_branch
          %192 = sbr.rel (%p190) target = $region28
        $region27: #{embedding_head_pallas.1} parent=11 // pred_region
          _
        $region28: #{embedding_head_pallas.1} parent=11 // pred_fallthru
          _
      $region12: #{embedding_head_pallas.1} parent=5 // pred_fallthru
        _
      %p193 = scmp.lt.s32.totalorder %s14, 2
      // Predicated region
      $region29: #{embedding_head_pallas.1} parent=5 // pred_check
        %p194 = pneg %p193
      $region30: #{embedding_head_pallas.1} parent=5 // pred_check_branch
        %196 = sbr.rel (%p194) target = $region32
      $region31: #{embedding_head_pallas.1} parent=5 // pred_region
        // Predicated region
        $region33: #{embedding_head_pallas.1} parent=31 // pred_check
          %p197 = pneg %p48
        $region34: #{embedding_head_pallas.1} parent=31 // pred_check_branch
          %199 = sbr.rel (%p197) target = $region36
        $region35: #{embedding_head_pallas.1} parent=31 // pred_region
          %s200 = smul.u32 32, %s22
          %p201 = scmp.lt.s32.totalorder %s21, 1
          %s202 = scalar_select %p201, %s21, 1
          %p203 = scmp.lt.s32.totalorder %s200, 31
          %s204 = scalar_select %p203, %s200, 31
          %s205 = smul.addr %s202, 32
          %s206 = sadd.s32 %s204, %s205
          %s207 = smul.addr %s206, 8
          %s208 = scalar_lea.vmem %s0, %s207
          %s209 = smul.u32 32, %s22
        $region36: #{embedding_head_pallas.1} parent=31 // pred_fallthru
          _
      $region32: #{embedding_head_pallas.1} parent=5 // pred_fallthru
        _
      %p210 = scmp.le.s32.totalorder 1, %s14
      %p211 = scmp.lt.s32.totalorder %s14, 3
      %p212 = pnand %p210, %p211
      %p213 = pneg %p212
      // Predicated region
      $region37: #{embedding_head_pallas.1} parent=5 // pred_check
        _
      $region38: #{embedding_head_pallas.1} parent=5 // pred_check_branch
        %215 = sbr.rel (%p212) target = $region40
      $region39: #{embedding_head_pallas.1} parent=5 // pred_region
        %s216 = ssub.s32 %s14, 1
        %s217 = smul.u32 32, %s24
        %p218 = scmp.lt.s32.totalorder %s23, 1
        %s219 = scalar_select %p218, %s23, 1
        %p220 = scmp.lt.s32.totalorder %s217, 31
        %s221 = scalar_select %p220, %s217, 31
        %s222 = smul.addr %s219, 32
        %s223 = sadd.s32 %s221, %s222
        %s224 = smul.addr %s223, 8
        %s225 = scalar_lea.vmem %s0, %s224
        %p226 = pneg %p54
        %p227 = pneg %p51
        %p228 = pneg %p75
        %p229 = pneg %p72
        %p230 = pneg %p96
        %p231 = pneg %p93
        %p232 = pneg %p117
        %p233 = pneg %p114
        %p234 = pneg %p138
        %p235 = pneg %p135
        %p236 = pneg %p166
        %p237 = pneg %p163
        %s238 = sand.u32 %s153, 1
        %s239 = scalar_lea.sflag [#allocation3], %s238
        %s240 = sand.u32 %s153, 1
        %s241 = smul.addr %s240, 256
        %s242 = scalar_lea.vmem [#allocation2], %s241
        %s243 = smul.u32 32, %s24
        %p244 = scmp.lt.s32.totalorder %s23, 1
        %s245 = scalar_select %p244, %s23, 1
        %p246 = scmp.lt.s32.totalorder %s243, 31
        %s247 = scalar_select %p246, %s243, 31
        %s248 = smul.addr %s245, 32
        %s249 = sadd.s32 %s247, %s248
        %s250 = smul.addr %s249, 8
        %s251 = scalar_lea.vmem %s0, %s250
        %s252 = smul.u32 32, %s24
        %s253 = smul.u32 32, %s24
        %v254 = vld [vmem:[%s251] sm:$0xff]
        %v255 = vld [vmem:[%s251 + $0x8] sm:$0xff]
        %v256 = vld [vmem:[%s251 + $0x10] sm:$0xff]
        %v257 = vld [vmem:[%s251 + $0x18] sm:$0xff]
        %v258 = vld [vmem:[%s251 + $0x20] sm:$0xff]
        %v259 = vld [vmem:[%s251 + $0x28] sm:$0xff]
        %v260 = vld [vmem:[%s251 + $0x30] sm:$0xff]
        %v261 = vld [vmem:[%s251 + $0x38] sm:$0xff]
        %v262 = vld [vmem:[%s251 + $0x40] sm:$0xff]
        %v263 = vld [vmem:[%s251 + $0x48] sm:$0xff]
        %v264 = vld [vmem:[%s251 + $0x50] sm:$0xff]
        %v265 = vld [vmem:[%s251 + $0x58] sm:$0xff]
        %v266 = vld [vmem:[%s251 + $0x60] sm:$0xff]
        %v267 = vld [vmem:[%s251 + $0x68] sm:$0xff]
        %v268 = vld [vmem:[%s251 + $0x70] sm:$0xff]
        %v269 = vld [vmem:[%s251 + $0x78] sm:$0xff]
        %v270 = vld [vmem:[%s251 + $0x80] sm:$0xff]
        %v271 = vld [vmem:[%s251 + $0x88] sm:$0xff]
        %v272 = vld [vmem:[%s251 + $0x90] sm:$0xff]
        %v273 = vld [vmem:[%s251 + $0x98] sm:$0xff]
        %v274 = vld [vmem:[%s251 + $0xa0] sm:$0xff]
        %v275 = vld [vmem:[%s251 + $0xa8] sm:$0xff]
        %v276 = vld [vmem:[%s251 + $0xb0] sm:$0xff]
        %v277 = vld [vmem:[%s251 + $0xb8] sm:$0xff]
        %v278 = vld [vmem:[%s251 + $0xc0] sm:$0xff]
        %v279 = vld [vmem:[%s251 + $0xc8] sm:$0xff]
        %v280 = vld [vmem:[%s251 + $0xd0] sm:$0xff]
        %v281 = vld [vmem:[%s251 + $0xd8] sm:$0xff]
        %v282 = vld [vmem:[%s251 + $0xe0] sm:$0xff]
        %v283 = vld [vmem:[%s251 + $0xe8] sm:$0xff]
        %v284 = vld [vmem:[%s251 + $0xf0] sm:$0xff]
        %v285 = vld [vmem:[%s251 + $0xf8] sm:$0xff]
        %v286 = vld [vmem:[%s1] sm:$0xff]
        %v287 = vld [vmem:[%s1 + $0x8] sm:$0xff]
        %v288 = vld [vmem:[%s1 + $0x10] sm:$0xff]
        %v289 = vld [vmem:[%s1 + $0x18] sm:$0xff]
        %v290 = vld [vmem:[%s1 + $0x20] sm:$0xff]
        %v291 = vld [vmem:[%s1 + $0x28] sm:$0xff]
        %v292 = vld [vmem:[%s1 + $0x30] sm:$0xff]
        %v293 = vld [vmem:[%s1 + $0x38] sm:$0xff]
        %v294 = vld [vmem:[%s1 + $0x40] sm:$0xff]
        %v295 = vld [vmem:[%s1 + $0x48] sm:$0xff]
        %v296 = vld [vmem:[%s1 + $0x50] sm:$0xff]
        %v297 = vld [vmem:[%s1 + $0x58] sm:$0xff]
        %v298 = vld [vmem:[%s1 + $0x60] sm:$0xff]
        %v299 = vld [vmem:[%s1 + $0x68] sm:$0xff]
        %v300 = vld [vmem:[%s1 + $0x70] sm:$0xff]
        %v301 = vld [vmem:[%s1 + $0x78] sm:$0xff]
        %v302 = vld [vmem:[%s2] sm:$0x1]
        %v304 = vlaneseq
        %v305 = vshrl.u32 %v304, 7
        %v306 = vsub.s32 0, %v305
        %v307 = vrot.slane %v302, %v306
        %309 = vmatprep.subr.mxu0 0.0
        %310 = vmatpush1.msra.mxu0 %v286
        %311 = vmatprep.subr.mxu0 0.0
        %312 = vmatpush1.msra.mxu0 %v287
        %313 = vmatprep.subr.mxu0 0.0
        %314 = vmatpush1.msra.mxu0 %v288
        %315 = vmatprep.subr.mxu0 0.0
        %316 = vmatpush1.msra.mxu0 %v289
        %317 = vmatprep.subr.mxu0 0.0
        %318 = vmatpush1.msra.mxu0 %v290
        %319 = vmatprep.subr.mxu0 0.0
        %320 = vmatpush1.msra.mxu0 %v291
        %321 = vmatprep.subr.mxu0 0.0
        %322 = vmatpush1.msra.mxu0 %v292
        %323 = vmatprep.subr.mxu0 0.0
        %324 = vmatpush1.msra.mxu0 %v293
        %325 = vmatprep.subr.mxu0 0.0
        %326 = vmatpush1.msra.mxu0 %v294
        %327 = vmatprep.subr.mxu0 0.0
        %328 = vmatpush1.msra.mxu0 %v295
        %329 = vmatprep.subr.mxu0 0.0
        %330 = vmatpush1.msra.mxu0 %v296
        %331 = vmatprep.subr.mxu0 0.0
        %332 = vmatpush1.msra.mxu0 %v297
        %333 = vmatprep.subr.mxu0 0.0
        %334 = vmatpush1.msra.mxu0 %v298
        %335 = vmatprep.subr.mxu0 0.0
        %336 = vmatpush1.msra.mxu0 %v299
        %337 = vmatprep.subr.mxu0 0.0
        %338 = vmatpush1.msra.mxu0 %v300
        %339 = vmatprep.subr.mxu0 0.0
        %340 = vmatpush1.msra.mxu0 %v301
        %341 = vmatprep.subr.mxu0 0.0
        %342 = vmatpush1.msra.mxu0 0.0
        %343 = vmatprep.subr.mxu0 0.0
        %344 = vmatpush1.msra.mxu0 0.0
        %345 = vmatprep.subr.mxu0 0.0
        %346 = vmatpush1.msra.mxu0 0.0
        %347 = vmatprep.subr.mxu0 0.0
        %348 = vmatpush1.msra.mxu0 0.0
        %349 = vmatprep.subr.mxu0 0.0
        %350 = vmatpush1.msra.mxu0 0.0
        %351 = vmatprep.subr.mxu0 0.0
        %352 = vmatpush1.msra.mxu0 0.0
        %353 = vmatprep.subr.mxu0 0.0
        %354 = vmatpush1.msra.mxu0 0.0
        %355 = vmatprep.subr.mxu0 0.0
        %356 = vmatpush1.msra.mxu0 0.0
        %357 = vmatprep.subr.mxu0 0.0
        %358 = vmatpush1.msra.mxu0 0.0
        %359 = vmatprep.subr.mxu0 0.0
        %360 = vmatpush1.msra.mxu0 0.0
        %361 = vmatprep.subr.mxu0 0.0
        %362 = vmatpush1.msra.mxu0 0.0
        %363 = vmatprep.subr.mxu0 0.0
        %364 = vmatpush1.msra.mxu0 0.0
        %365 = vmatprep.subr.mxu0 0.0
        %366 = vmatpush1.msra.mxu0 0.0
        %367 = vmatprep.subr.mxu0 0.0
        %368 = vmatpush1.msra.mxu0 0.0
        %369 = vmatprep.subr.mxu0 0.0
        %370 = vmatpush1.msra.mxu0 0.0
        %371 = vmatprep.subr.mxu0 0.0
        %372 = vmatpush1.msra.mxu0 0.0
        %373 = vmatprep.mubr.f32.mxu0 0.0
        %374 = vmatmul.mubr.f32.gmra.mrb[0].mxu0 %v254
        %v375 = vpop.f32.mrb[0].mxu0
        %v376 = vadd.f32 %v307, %v375
        %v377 = vpop.f32.mrb[0].mxu0
        %378 = vmatprep.mubr.f32.mxu0 0.0
        %379 = vmatmul.mubr.f32.gmra.mrb[0].mxu0 %v255
        %v380 = vpop.f32.mrb[0].mxu0
        %v381 = vadd.f32 %v307, %v380
        %v382 = vpop.f32.mrb[0].mxu0
        %383 = vmatprep.mubr.f32.mxu0 0.0
        %384 = vmatmul.mubr.f32.gmra.mrb[0].mxu0 %v256
        %v385 = vpop.f32.mrb[0].mxu0
        %v386 = vadd.f32 %v307, %v385
        %v387 = vpop.f32.mrb[0].mxu0
        %388 = vmatprep.mubr.f32.mxu0 0.0
        %389 = vmatmul.mubr.f32.gmra.mrb[0].mxu0 %v257
        %v390 = vpop.f32.mrb[0].mxu0
        %v391 = vadd.f32 %v307, %v390
        %v392 = vpop.f32.mrb[0].mxu0
        %393 = vmatprep.mubr.f32.mxu0 0.0
        %394 = vmatmul.mubr.f32.gmra.mrb[0].mxu0 %v258
        %v395 = vpop.f32.mrb[0].mxu0
        %v396 = vadd.f32 %v307, %v395
        %v397 = vpop.f32.mrb[0].mxu0
        %398 = vmatprep.mubr.f32.mxu0 0.0
        %399 = vmatmul.mubr.f32.gmra.mrb[0].mxu0 %v259
        %v400 = vpop.f32.mrb[0].mxu0
        %v401 = vadd.f32 %v307, %v400
        %v402 = vpop.f32.mrb[0].mxu0
        %403 = vmatprep.mubr.f32.mxu0 0.0
        %404 = vmatmul.mubr.f32.gmra.mrb[0].mxu0 %v260
        %v405 = vpop.f32.mrb[0].mxu0
        %v406 = vadd.f32 %v307, %v405
        %v407 = vpop.f32.mrb[0].mxu0
        %408 = vmatprep.mubr.f32.mxu0 0.0
        %409 = vmatmul.mubr.f32.gmra.mrb[0].mxu0 %v261
        %v410 = vpop.f32.mrb[0].mxu0
        %v411 = vadd.f32 %v307, %v410
        %v412 = vpop.f32.mrb[0].mxu0
        %413 = vmatprep.mubr.f32.mxu0 0.0
        %414 = vmatmul.mubr.f32.gmra.mrb[0].mxu0 %v262
        %v415 = vpop.f32.mrb[0].mxu0
        %v416 = vadd.f32 %v307, %v415
        %v417 = vpop.f32.mrb[0].mxu0
        %418 = vmatprep.mubr.f32.mxu0 0.0
        %419 = vmatmul.mubr.f32.gmra.mrb[0].mxu0 %v263
        %v420 = vpop.f32.mrb[0].mxu0
        %v421 = vadd.f32 %v307, %v420
        %v422 = vpop.f32.mrb[0].mxu0
        %423 = vmatprep.mubr.f32.mxu0 0.0
        %424 = vmatmul.mubr.f32.gmra.mrb[0].mxu0 %v264
        %v425 = vpop.f32.mrb[0].mxu0
        %v426 = vadd.f32 %v307, %v425
        %v427 = vpop.f32.mrb[0].mxu0
        %428 = vmatprep.mubr.f32.mxu0 0.0
        %429 = vmatmul.mubr.f32.gmra.mrb[0].mxu0 %v265
        %v430 = vpop.f32.mrb[0].mxu0
        %v431 = vadd.f32 %v307, %v430
        %v432 = vpop.f32.mrb[0].mxu0
        %433 = vmatprep.mubr.f32.mxu0 0.0
        %434 = vmatmul.mubr.f32.gmra.mrb[0].mxu0 %v266
        %v435 = vpop.f32.mrb[0].mxu0
        %v436 = vadd.f32 %v307, %v435
        %v437 = vpop.f32.mrb[0].mxu0
        %438 = vmatprep.mubr.f32.mxu0 0.0
        %439 = vmatmul.mubr.f32.gmra.mrb[0].mxu0 %v267
        %v440 = vpop.f32.mrb[0].mxu0
        %v441 = vadd.f32 %v307, %v440
        %v442 = vpop.f32.mrb[0].mxu0
        %443 = vmatprep.mubr.f32.mxu0 0.0
        %444 = vmatmul.mubr.f32.gmra.mrb[0].mxu0 %v268
        %v445 = vpop.f32.mrb[0].mxu0
        %v446 = vadd.f32 %v307, %v445
        %v447 = vpop.f32.mrb[0].mxu0
        %448 = vmatprep.mubr.f32.mxu0 0.0
        %449 = vmatmul.mubr.f32.gmra.mrb[0].mxu0 %v269
        %v450 = vpop.f32.mrb[0].mxu0
        %v451 = vadd.f32 %v307, %v450
        %v452 = vpop.f32.mrb[0].mxu0
        %453 = vmatprep.mubr.f32.mxu0 0.0
        %454 = vmatmul.mubr.f32.gmra.mrb[0].mxu0 %v270
        %v455 = vpop.f32.mrb[0].mxu0
        %v456 = vadd.f32 %v307, %v455
        %v457 = vpop.f32.mrb[0].mxu0
        %458 = vmatprep.mubr.f32.mxu0 0.0
        %459 = vmatmul.mubr.f32.gmra.mrb[0].mxu0 %v271
        %v460 = vpop.f32.mrb[0].mxu0
        %v461 = vadd.f32 %v307, %v460
        %v462 = vpop.f32.mrb[0].mxu0
        %463 = vmatprep.mubr.f32.mxu0 0.0
        %464 = vmatmul.mubr.f32.gmra.mrb[0].mxu0 %v272
        %v465 = vpop.f32.mrb[0].mxu0
        %v466 = vadd.f32 %v307, %v465
        %v467 = vpop.f32.mrb[0].mxu0
        %468 = vmatprep.mubr.f32.mxu0 0.0
        %469 = vmatmul.mubr.f32.gmra.mrb[0].mxu0 %v273
        %v470 = vpop.f32.mrb[0].mxu0
        %v471 = vadd.f32 %v307, %v470
        %v472 = vpop.f32.mrb[0].mxu0
        %473 = vmatprep.mubr.f32.mxu0 0.0
        %474 = vmatmul.mubr.f32.gmra.mrb[0].mxu0 %v274
        %v475 = vpop.f32.mrb[0].mxu0
        %v476 = vadd.f32 %v307, %v475
        %v477 = vpop.f32.mrb[0].mxu0
        %478 = vmatprep.mubr.f32.mxu0 0.0
        %479 = vmatmul.mubr.f32.gmra.mrb[0].mxu0 %v275
        %v480 = vpop.f32.mrb[0].mxu0
        %v481 = vadd.f32 %v307, %v480
        %v482 = vpop.f32.mrb[0].mxu0
        %483 = vmatprep.mubr.f32.mxu0 0.0
        %484 = vmatmul.mubr.f32.gmra.mrb[0].mxu0 %v276
        %v485 = vpop.f32.mrb[0].mxu0
        %v486 = vadd.f32 %v307, %v485
        %v487 = vpop.f32.mrb[0].mxu0
        %488 = vmatprep.mubr.f32.mxu0 0.0
        %489 = vmatmul.mubr.f32.gmra.mrb[0].mxu0 %v277
        %v490 = vpop.f32.mrb[0].mxu0
        %v491 = vadd.f32 %v307, %v490
        %v492 = vpop.f32.mrb[0].mxu0
        %493 = vmatprep.mubr.f32.mxu0 0.0
        %494 = vmatmul.mubr.f32.gmra.mrb[0].mxu0 %v278
        %v495 = vpop.f32.mrb[0].mxu0
        %v496 = vadd.f32 %v307, %v495
        %v497 = vpop.f32.mrb[0].mxu0
        %498 = vmatprep.mubr.f32.mxu0 0.0
        %499 = vmatmul.mubr.f32.gmra.mrb[0].mxu0 %v279
        %v500 = vpop.f32.mrb[0].mxu0
        %v501 = vadd.f32 %v307, %v500
        %v502 = vpop.f32.mrb[0].mxu0
        %503 = vmatprep.mubr.f32.mxu0 0.0
        %504 = vmatmul.mubr.f32.gmra.mrb[0].mxu0 %v280
        %v505 = vpop.f32.mrb[0].mxu0
        %v506 = vadd.f32 %v307, %v505
        %v507 = vpop.f32.mrb[0].mxu0
        %508 = vmatprep.mubr.f32.mxu0 0.0
        %509 = vmatmul.mubr.f32.gmra.mrb[0].mxu0 %v281
        %v510 = vpop.f32.mrb[0].mxu0
        %v511 = vadd.f32 %v307, %v510
        %v512 = vpop.f32.mrb[0].mxu0
        %513 = vmatprep.mubr.f32.mxu0 0.0
        %514 = vmatmul.mubr.f32.gmra.mrb[0].mxu0 %v282
        %v515 = vpop.f32.mrb[0].mxu0
        %v516 = vadd.f32 %v307, %v515
        %v517 = vpop.f32.mrb[0].mxu0
        %518 = vmatprep.mubr.f32.mxu0 0.0
        %519 = vmatmul.mubr.f32.gmra.mrb[0].mxu0 %v283
        %v520 = vpop.f32.mrb[0].mxu0
        %v521 = vadd.f32 %v307, %v520
        %v522 = vpop.f32.mrb[0].mxu0
        %523 = vmatprep.mubr.f32.mxu0 0.0
        %524 = vmatmul.mubr.f32.gmra.mrb[0].mxu0 %v284
        %v525 = vpop.f32.mrb[0].mxu0
        %v526 = vadd.f32 %v307, %v525
        %v527 = vpop.f32.mrb[0].mxu0
        %528 = vmatprep.mubr.f32.mxu0 0.0
        %529 = vmatmul.mubr.f32.gmra.mrb[0].mxu0 %v285
        %v530 = vpop.f32.mrb[0].mxu0
        %v531 = vadd.f32 %v307, %v530
        %v532 = vpop.f32.mrb[0].mxu0
        %533 = vdwg.mxu0
        %v534 = vmax.f32 %v376, 0.0
        %v535 = vmax.f32 %v381, 0.0
        %v536 = vmax.f32 %v386, 0.0
        %v537 = vmax.f32 %v391, 0.0
        %v538 = vmax.f32 %v396, 0.0
        %v539 = vmax.f32 %v401, 0.0
        %v540 = vmax.f32 %v406, 0.0
        %v541 = vmax.f32 %v411, 0.0
        %v542 = vmax.f32 %v416, 0.0
        %v543 = vmax.f32 %v421, 0.0
        %v544 = vmax.f32 %v426, 0.0
        %v545 = vmax.f32 %v431, 0.0
        %v546 = vmax.f32 %v436, 0.0
        %v547 = vmax.f32 %v441, 0.0
        %v548 = vmax.f32 %v446, 0.0
        %v549 = vmax.f32 %v451, 0.0
        %v550 = vmax.f32 %v456, 0.0
        %v551 = vmax.f32 %v461, 0.0
        %v552 = vmax.f32 %v466, 0.0
        %v553 = vmax.f32 %v471, 0.0
        %v554 = vmax.f32 %v476, 0.0
        %v555 = vmax.f32 %v481, 0.0
        %v556 = vmax.f32 %v486, 0.0
        %v557 = vmax.f32 %v491, 0.0
        %v558 = vmax.f32 %v496, 0.0
        %v559 = vmax.f32 %v501, 0.0
        %v560 = vmax.f32 %v506, 0.0
        %v561 = vmax.f32 %v511, 0.0
        %v562 = vmax.f32 %v516, 0.0
        %v563 = vmax.f32 %v521, 0.0
        %v564 = vmax.f32 %v526, 0.0
        %v565 = vmax.f32 %v531, 0.0
        %v566 = vld [vmem:[%s3] sm:$0xff]
        %v567 = vld [vmem:[%s3 + $0x8] sm:$0xff]
        %v568 = vld [vmem:[%s3 + $0x10] sm:$0xff]
        %v569 = vld [vmem:[%s3 + $0x18] sm:$0xff]
        %v570 = vld [vmem:[%s3 + $0x20] sm:$0xff]
        %v571 = vld [vmem:[%s3 + $0x28] sm:$0xff]
        %v572 = vld [vmem:[%s3 + $0x30] sm:$0xff]
        %v573 = vld [vmem:[%s3 + $0x38] sm:$0xff]
        %v574 = vld [vmem:[%s3 + $0x40] sm:$0xff]
        %v575 = vld [vmem:[%s3 + $0x48] sm:$0xff]
        %v576 = vld [vmem:[%s3 + $0x50] sm:$0xff]
        %v577 = vld [vmem:[%s3 + $0x58] sm:$0xff]
        %v578 = vld [vmem:[%s3 + $0x60] sm:$0xff]
        %v579 = vld [vmem:[%s3 + $0x68] sm:$0xff]
        %v580 = vld [vmem:[%s3 + $0x70] sm:$0xff]
        %v581 = vld [vmem:[%s3 + $0x78] sm:$0xff]
        %v582 = vld [vmem:[%s4] sm:$0x1]
        %v584 = vlaneseq
        %v585 = vshrl.u32 %v584, 7
        %v586 = vsub.s32 0, %v585
        %v587 = vrot.slane %v582, %v586
        %589 = vmatprep.subr.mxu0 0.0
        %590 = vmatpush1.msra.mxu0 %v566
        %591 = vmatprep.subr.mxu0 0.0
        %592 = vmatpush1.msra.mxu0 %v567
        %593 = vmatprep.subr.mxu0 0.0
        %594 = vmatpush1.msra.mxu0 %v568
        %595 = vmatprep.subr.mxu0 0.0
        %596 = vmatpush1.msra.mxu0 %v569
        %597 = vmatprep.subr.mxu0 0.0
        %598 = vmatpush1.msra.mxu0 %v570
        %599 = vmatprep.subr.mxu0 0.0
        %600 = vmatpush1.msra.mxu0 %v571
        %601 = vmatprep.subr.mxu0 0.0
        %602 = vmatpush1.msra.mxu0 %v572
        %603 = vmatprep.subr.mxu0 0.0
        %604 = vmatpush1.msra.mxu0 %v573
        %605 = vmatprep.subr.mxu0 0.0
        %606 = vmatpush1.msra.mxu0 %v574
        %607 = vmatprep.subr.mxu0 0.0
        %608 = vmatpush1.msra.mxu0 %v575
        %609 = vmatprep.subr.mxu0 0.0
        %610 = vmatpush1.msra.mxu0 %v576
        %611 = vmatprep.subr.mxu0 0.0
        %612 = vmatpush1.msra.mxu0 %v577
        %613 = vmatprep.subr.mxu0 0.0
        %614 = vmatpush1.msra.mxu0 %v578
        %615 = vmatprep.subr.mxu0 0.0
        %616 = vmatpush1.msra.mxu0 %v579
        %617 = vmatprep.subr.mxu0 0.0
        %618 = vmatpush1.msra.mxu0 %v580
        %619 = vmatprep.subr.mxu0 0.0
        %620 = vmatpush1.msra.mxu0 %v581
        %621 = vmatprep.subr.mxu0 0.0
        %622 = vmatpush1.msra.mxu0 0.0
        %623 = vmatprep.subr.mxu0 0.0
        %624 = vmatpush1.msra.mxu0 0.0
        %625 = vmatprep.subr.mxu0 0.0
        %626 = vmatpush1.msra.mxu0 0.0
        %627 = vmatprep.subr.mxu0 0.0
        %628 = vmatpush1.msra.mxu0 0.0
        %629 = vmatprep.subr.mxu0 0.0
        %630 = vmatpush1.msra.mxu0 0.0
        %631 = vmatprep.subr.mxu0 0.0
        %632 = vmatpush1.msra.mxu0 0.0
        %633 = vmatprep.subr.mxu0 0.0
        %634 = vmatpush1.msra.mxu0 0.0
        %635 = vmatprep.subr.mxu0 0.0
        %636 = vmatpush1.msra.mxu0 0.0
        %637 = vmatprep.subr.mxu0 0.0
        %638 = vmatpush1.msra.mxu0 0.0
        %639 = vmatprep.subr.mxu0 0.0
        %640 = vmatpush1.msra.mxu0 0.0
        %641 = vmatprep.subr.mxu0 0.0
        %642 = vmatpush1.msra.mxu0 0.0
        %643 = vmatprep.subr.mxu0 0.0
        %644 = vmatpush1.msra.mxu0 0.0
        %645 = vmatprep.subr.mxu0 0.0
        %646 = vmatpush1.msra.mxu0 0.0
        %647 = vmatprep.subr.mxu0 0.0
        %648 = vmatpush1.msra.mxu0 0.0
        %649 = vmatprep.subr.mxu0 0.0
        %650 = vmatpush1.msra.mxu0 0.0
        %651 = vmatprep.subr.mxu0 0.0
        %652 = vmatpush1.msra.mxu0 0.0
        %653 = vmatprep.mubr.f32.mxu0 0.0
        %654 = vmatmul.mubr.f32.gmra.mrb[0].mxu0 %v534
        %v655 = vpop.f32.mrb[0].mxu0
        %v656 = vadd.f32 %v587, %v655
        %v657 = vpop.f32.mrb[0].mxu0
        %658 = vmatprep.mubr.f32.mxu0 0.0
        %659 = vmatmul.mubr.f32.gmra.mrb[0].mxu0 %v535
        %v660 = vpop.f32.mrb[0].mxu0
        %v661 = vadd.f32 %v587, %v660
        %v662 = vpop.f32.mrb[0].mxu0
        %663 = vmatprep.mubr.f32.mxu0 0.0
        %664 = vmatmul.mubr.f32.gmra.mrb[0].mxu0 %v536
        %v665 = vpop.f32.mrb[0].mxu0
        %v666 = vadd.f32 %v587, %v665
        %v667 = vpop.f32.mrb[0].mxu0
        %668 = vmatprep.mubr.f32.mxu0 0.0
        %669 = vmatmul.mubr.f32.gmra.mrb[0].mxu0 %v537
        %v670 = vpop.f32.mrb[0].mxu0
        %v671 = vadd.f32 %v587, %v670
        %v672 = vpop.f32.mrb[0].mxu0
        %673 = vmatprep.mubr.f32.mxu0 0.0
        %674 = vmatmul.mubr.f32.gmra.mrb[0].mxu0 %v538
        %v675 = vpop.f32.mrb[0].mxu0
        %v676 = vadd.f32 %v587, %v675
        %v677 = vpop.f32.mrb[0].mxu0
        %678 = vmatprep.mubr.f32.mxu0 0.0
        %679 = vmatmul.mubr.f32.gmra.mrb[0].mxu0 %v539
        %v680 = vpop.f32.mrb[0].mxu0
        %v681 = vadd.f32 %v587, %v680
        %v682 = vpop.f32.mrb[0].mxu0
        %683 = vmatprep.mubr.f32.mxu0 0.0
        %684 = vmatmul.mubr.f32.gmra.mrb[0].mxu0 %v540
        %v685 = vpop.f32.mrb[0].mxu0
        %v686 = vadd.f32 %v587, %v685
        %v687 = vpop.f32.mrb[0].mxu0
        %688 = vmatprep.mubr.f32.mxu0 0.0
        %689 = vmatmul.mubr.f32.gmra.mrb[0].mxu0 %v541
        %v690 = vpop.f32.mrb[0].mxu0
        %v691 = vadd.f32 %v587, %v690
        %v692 = vpop.f32.mrb[0].mxu0
        %693 = vmatprep.mubr.f32.mxu0 0.0
        %694 = vmatmul.mubr.f32.gmra.mrb[0].mxu0 %v542
        %v695 = vpop.f32.mrb[0].mxu0
        %v696 = vadd.f32 %v587, %v695
        %v697 = vpop.f32.mrb[0].mxu0
        %698 = vmatprep.mubr.f32.mxu0 0.0
        %699 = vmatmul.mubr.f32.gmra.mrb[0].mxu0 %v543
        %v700 = vpop.f32.mrb[0].mxu0
        %v701 = vadd.f32 %v587, %v700
        %v702 = vpop.f32.mrb[0].mxu0
        %703 = vmatprep.mubr.f32.mxu0 0.0
        %704 = vmatmul.mubr.f32.gmra.mrb[0].mxu0 %v544
        %v705 = vpop.f32.mrb[0].mxu0
        %v706 = vadd.f32 %v587, %v705
        %v707 = vpop.f32.mrb[0].mxu0
        %708 = vmatprep.mubr.f32.mxu0 0.0
        %709 = vmatmul.mubr.f32.gmra.mrb[0].mxu0 %v545
        %v710 = vpop.f32.mrb[0].mxu0
        %v711 = vadd.f32 %v587, %v710
        %v712 = vpop.f32.mrb[0].mxu0
        %713 = vmatprep.mubr.f32.mxu0 0.0
        %714 = vmatmul.mubr.f32.gmra.mrb[0].mxu0 %v546
        %v715 = vpop.f32.mrb[0].mxu0
        %v716 = vadd.f32 %v587, %v715
        %v717 = vpop.f32.mrb[0].mxu0
        %718 = vmatprep.mubr.f32.mxu0 0.0
        %719 = vmatmul.mubr.f32.gmra.mrb[0].mxu0 %v547
        %v720 = vpop.f32.mrb[0].mxu0
        %v721 = vadd.f32 %v587, %v720
        %v722 = vpop.f32.mrb[0].mxu0
        %723 = vmatprep.mubr.f32.mxu0 0.0
        %724 = vmatmul.mubr.f32.gmra.mrb[0].mxu0 %v548
        %v725 = vpop.f32.mrb[0].mxu0
        %v726 = vadd.f32 %v587, %v725
        %v727 = vpop.f32.mrb[0].mxu0
        %728 = vmatprep.mubr.f32.mxu0 0.0
        %729 = vmatmul.mubr.f32.gmra.mrb[0].mxu0 %v549
        %v730 = vpop.f32.mrb[0].mxu0
        %v731 = vadd.f32 %v587, %v730
        %v732 = vpop.f32.mrb[0].mxu0
        %733 = vmatprep.mubr.f32.mxu0 0.0
        %734 = vmatmul.mubr.f32.gmra.mrb[0].mxu0 %v550
        %v735 = vpop.f32.mrb[0].mxu0
        %v736 = vadd.f32 %v587, %v735
        %v737 = vpop.f32.mrb[0].mxu0
        %738 = vmatprep.mubr.f32.mxu0 0.0
        %739 = vmatmul.mubr.f32.gmra.mrb[0].mxu0 %v551
        %v740 = vpop.f32.mrb[0].mxu0
        %v741 = vadd.f32 %v587, %v740
        %v742 = vpop.f32.mrb[0].mxu0
        %743 = vmatprep.mubr.f32.mxu0 0.0
        %744 = vmatmul.mubr.f32.gmra.mrb[0].mxu0 %v552
        %v745 = vpop.f32.mrb[0].mxu0
        %v746 = vadd.f32 %v587, %v745
        %v747 = vpop.f32.mrb[0].mxu0
        %748 = vmatprep.mubr.f32.mxu0 0.0
        %749 = vmatmul.mubr.f32.gmra.mrb[0].mxu0 %v553
        %v750 = vpop.f32.mrb[0].mxu0
        %v751 = vadd.f32 %v587, %v750
        %v752 = vpop.f32.mrb[0].mxu0
        %753 = vmatprep.mubr.f32.mxu0 0.0
        %754 = vmatmul.mubr.f32.gmra.mrb[0].mxu0 %v554
        %v755 = vpop.f32.mrb[0].mxu0
        %v756 = vadd.f32 %v587, %v755
        %v757 = vpop.f32.mrb[0].mxu0
        %758 = vmatprep.mubr.f32.mxu0 0.0
        %759 = vmatmul.mubr.f32.gmra.mrb[0].mxu0 %v555
        %v760 = vpop.f32.mrb[0].mxu0
        %v761 = vadd.f32 %v587, %v760
        %v762 = vpop.f32.mrb[0].mxu0
        %763 = vmatprep.mubr.f32.mxu0 0.0
        %764 = vmatmul.mubr.f32.gmra.mrb[0].mxu0 %v556
        %v765 = vpop.f32.mrb[0].mxu0
        %v766 = vadd.f32 %v587, %v765
        %v767 = vpop.f32.mrb[0].mxu0
        %768 = vmatprep.mubr.f32.mxu0 0.0
        %769 = vmatmul.mubr.f32.gmra.mrb[0].mxu0 %v557
        %v770 = vpop.f32.mrb[0].mxu0
        %v771 = vadd.f32 %v587, %v770
        %v772 = vpop.f32.mrb[0].mxu0
        %773 = vmatprep.mubr.f32.mxu0 0.0
        %774 = vmatmul.mubr.f32.gmra.mrb[0].mxu0 %v558
        %v775 = vpop.f32.mrb[0].mxu0
        %v776 = vadd.f32 %v587, %v775
        %v777 = vpop.f32.mrb[0].mxu0
        %778 = vmatprep.mubr.f32.mxu0 0.0
        %779 = vmatmul.mubr.f32.gmra.mrb[0].mxu0 %v559
        %v780 = vpop.f32.mrb[0].mxu0
        %v781 = vadd.f32 %v587, %v780
        %v782 = vpop.f32.mrb[0].mxu0
        %783 = vmatprep.mubr.f32.mxu0 0.0
        %784 = vmatmul.mubr.f32.gmra.mrb[0].mxu0 %v560
        %v785 = vpop.f32.mrb[0].mxu0
        %v786 = vadd.f32 %v587, %v785
        %v787 = vpop.f32.mrb[0].mxu0
        %788 = vmatprep.mubr.f32.mxu0 0.0
        %789 = vmatmul.mubr.f32.gmra.mrb[0].mxu0 %v561
        %v790 = vpop.f32.mrb[0].mxu0
        %v791 = vadd.f32 %v587, %v790
        %v792 = vpop.f32.mrb[0].mxu0
        %793 = vmatprep.mubr.f32.mxu0 0.0
        %794 = vmatmul.mubr.f32.gmra.mrb[0].mxu0 %v562
        %v795 = vpop.f32.mrb[0].mxu0
        %v796 = vadd.f32 %v587, %v795
        %v797 = vpop.f32.mrb[0].mxu0
        %798 = vmatprep.mubr.f32.mxu0 0.0
        %799 = vmatmul.mubr.f32.gmra.mrb[0].mxu0 %v563
        %v800 = vpop.f32.mrb[0].mxu0
        %v801 = vadd.f32 %v587, %v800
        %v802 = vpop.f32.mrb[0].mxu0
        %803 = vmatprep.mubr.f32.mxu0 0.0
        %804 = vmatmul.mubr.f32.gmra.mrb[0].mxu0 %v564
        %v805 = vpop.f32.mrb[0].mxu0
        %v806 = vadd.f32 %v587, %v805
        %v807 = vpop.f32.mrb[0].mxu0
        %808 = vmatprep.mubr.f32.mxu0 0.0
        %809 = vmatmul.mubr.f32.gmra.mrb[0].mxu0 %v565
        %v810 = vpop.f32.mrb[0].mxu0
        %v811 = vadd.f32 %v587, %v810
        %v812 = vpop.f32.mrb[0].mxu0
        %813 = vdwg.mxu0
        %814 = vst [vmem:[%s242] sm:$0xff] %v656
        %815 = vst [vmem:[%s242 + $0x8] sm:$0xff] %v661
        %816 = vst [vmem:[%s242 + $0x10] sm:$0xff] %v666
        %817 = vst [vmem:[%s242 + $0x18] sm:$0xff] %v671
        %818 = vst [vmem:[%s242 + $0x20] sm:$0xff] %v676
        %819 = vst [vmem:[%s242 + $0x28] sm:$0xff] %v681
        %820 = vst [vmem:[%s242 + $0x30] sm:$0xff] %v686
        %821 = vst [vmem:[%s242 + $0x38] sm:$0xff] %v691
        %822 = vst [vmem:[%s242 + $0x40] sm:$0xff] %v696
        %823 = vst [vmem:[%s242 + $0x48] sm:$0xff] %v701
        %824 = vst [vmem:[%s242 + $0x50] sm:$0xff] %v706
        %825 = vst [vmem:[%s242 + $0x58] sm:$0xff] %v711
        %826 = vst [vmem:[%s242 + $0x60] sm:$0xff] %v716
        %827 = vst [vmem:[%s242 + $0x68] sm:$0xff] %v721
        %828 = vst [vmem:[%s242 + $0x70] sm:$0xff] %v726
        %829 = vst [vmem:[%s242 + $0x78] sm:$0xff] %v731
        %830 = vst [vmem:[%s242 + $0x80] sm:$0xff] %v736
        %831 = vst [vmem:[%s242 + $0x88] sm:$0xff] %v741
        %832 = vst [vmem:[%s242 + $0x90] sm:$0xff] %v746
        %833 = vst [vmem:[%s242 + $0x98] sm:$0xff] %v751
        %834 = vst [vmem:[%s242 + $0xa0] sm:$0xff] %v756
        %835 = vst [vmem:[%s242 + $0xa8] sm:$0xff] %v761
        %836 = vst [vmem:[%s242 + $0xb0] sm:$0xff] %v766
        %837 = vst [vmem:[%s242 + $0xb8] sm:$0xff] %v771
        %838 = vst [vmem:[%s242 + $0xc0] sm:$0xff] %v776
        %839 = vst [vmem:[%s242 + $0xc8] sm:$0xff] %v781
        %840 = vst [vmem:[%s242 + $0xd0] sm:$0xff] %v786
        %841 = vst [vmem:[%s242 + $0xd8] sm:$0xff] %v791
        %842 = vst [vmem:[%s242 + $0xe0] sm:$0xff] %v796
        %843 = vst [vmem:[%s242 + $0xe8] sm:$0xff] %v801
        %844 = vst [vmem:[%s242 + $0xf0] sm:$0xff] %v806
        %845 = vst [vmem:[%s242 + $0xf8] sm:$0xff] %v811
        %s846 = sand.u32 %s153, 1
        %s847 = scalar_lea.sflag [#allocation3], %s846
        %s848 = sand.u32 %s153, 1
        %s849 = smul.addr %s848, 256
        %s850 = scalar_lea.vmem [#allocation2], %s849
        // Predicated region
        $region41: #{embedding_head_pallas.1} parent=39 // pred_check
          %p851 = pneg %p163
        $region42: #{embedding_head_pallas.1} parent=39 // pred_check_branch
          %853 = sbr.rel (%p851) target = $region44
        $region43: #{embedding_head_pallas.1} parent=39 // pred_region
          %s854 = smul.u32 32, %s24
          %s856 = ssub.s32 4096, 4096
          %857 = vsyncadd %s847, %s856
          %s858 = smul.addr %s23, 32
          %s859 = sadd.s32 %s854, %s858
          %s860 = smul.addr %s859, 128
          %s861 = scalar_lea.hbm %s5, %s860
          %s862 = sshll.u32 %s850, 4
          %s863 = int_to_ptr.vmem [resolvable:$true] %s862
          %868 = dma.vmem_to_hbm [thread:$0]  %s863, 4096, %s861, %s847, 128, 128, 8
        $region44: #{embedding_head_pallas.1} parent=39 // pred_fallthru
          _
      $region40: #{embedding_head_pallas.1} parent=5 // pred_fallthru
        _
      %p869 = scmp.le.s32.totalorder 2, %s14
      // Predicated region
      $region45: #{embedding_head_pallas.1} parent=5 // pred_check
        %p870 = pneg %p869
      $region46: #{embedding_head_pallas.1} parent=5 // pred_check_branch
        %872 = sbr.rel (%p870) target = $region48
      $region47: #{embedding_head_pallas.1} parent=5 // pred_region
        %s873 = ssub.s32 %s14, 2
        // Predicated region
        $region49: #{embedding_head_pallas.1} parent=47 // pred_check
          %p874 = pneg %p169
        $region50: #{embedding_head_pallas.1} parent=47 // pred_check_branch
          %876 = sbr.rel (%p874) target = $region52
        $region51: #{embedding_head_pallas.1} parent=47 // pred_region
          %s877 = sand.u32 %s154, 1
          %s878 = scalar_lea.sflag [#allocation3], %s877
          %s879 = sand.u32 %s154, 1
          %s880 = smul.addr %s879, 256
          %s881 = scalar_lea.vmem [#allocation2], %s880
          %882 = dma.done %s878, 4096
        $region52: #{embedding_head_pallas.1} parent=47 // pred_fallthru
          _
      $region48: #{embedding_head_pallas.1} parent=5 // pred_fallthru
        _
    $region6: #{embedding_head_pallas.1} parent=1 // loop_footer
      %s18 = sadd.s32 1, %s14
    $region7: #{embedding_head_pallas.1} parent=1 // loop_footer_branch
      %13 = sbr.rel target = $region3
    $region8: #{embedding_head_pallas.1} parent=1 // loop_exit
      _
    %883 = vsyncpa [#allocation3], 1
    %s884 = scalar_lea.sflag [#allocation3], 1
    %885 = vsyncpa %s884, 1

</llo_original>
